<compile_context>
chip_gen: v7x
topology: tpu7x:2x2x1
jax: 0.10.0
libtpu: 0.0.40
codegen_flags: <defaults>
</compile_context>

<pallas_src>
import functools

import jax
import jax.numpy as jnp
from jax.experimental import pallas as pl
from jax.experimental.pallas import tpu as pltpu

_LANE = 128


def _round_up(n: int, m: int) -> int:
    return ((n + m - 1) // m) * m


def _sigmoid(x):
    # exp lands on the EUP; reciprocal is full precision (approx=False) since
    # neither EUP nor VALU is close to the binding slot here.
    return pl.reciprocal(1.0 + jnp.exp(-x))


def mlp_kernel(x_ref, w1_ref, b1_ref, w2_ref, b2_ref, o_ref):
    # In-kernel bf16 cast of x (cheap VPU op hidden under DMA/MXU); weights are
    # prepared as bf16 once; accumulation and all elementwise math stay in f32
    # (v5e has no bf16 VPU/EUP path).
    x = x_ref[...].astype(jnp.bfloat16)
    h = jnp.dot(x, w1_ref[...], preferred_element_type=jnp.float32)
    h = _sigmoid(h + b1_ref[...])
    y = jnp.dot(h.astype(jnp.bfloat16), w2_ref[...],
                preferred_element_type=jnp.float32)
    # Unpadded (B, D_out) store: no 8x-padded f32 writeback, no wrapper slice.
    # v5e note: if the narrow masked vst ever becomes the binding slot there,
    # fall back to a lane-dense bf16 padded output.
    o_ref[...] = _sigmoid(y + b2_ref[...]).astype(o_ref.dtype)


def prepare_params(w1, b1, w2, b2):
    """One-time param prep.

    Only the hidden dim H is zero-padded to a lane multiple (128) so the
    intermediate h and the MXU contraction are lane-dense.  Padding is exact:
    padded W1 columns + zero bias give h_pad = sigmoid(0) = 0.5, but the
    corresponding W2 rows are zero, so they contribute nothing.  D_out is left
    unpadded so the kernel writes only real output columns.  Weights are cast
    to bf16 once (MXU-native operands); biases stay f32.
    """
    D_in, H = w1.shape
    D_out = w2.shape[1]
    Hp = _round_up(H, _LANE)

    b1 = jnp.reshape(b1, (1, H)).astype(jnp.float32)
    b2 = jnp.reshape(b2, (1, D_out)).astype(jnp.float32)

    w1p = jnp.pad(w1, ((0, 0), (0, Hp - H))).astype(jnp.bfloat16)
    b1p = jnp.pad(b1, ((0, 0), (0, Hp - H)))
    w2p = jnp.pad(w2, ((0, Hp - H), (0, 0))).astype(jnp.bfloat16)
    return w1p, b1p, w2p, b2


@functools.partial(jax.jit, static_argnames=("tile_b",))
def net_forward(x, w1p, b1p, w2p, b2p, *, tile_b=2048):
    """x: (B, D_in) f32; params from prepare_params(); returns (B, D_out) f32."""
    B, D_in = x.shape
    Hp = w1p.shape[1]
    D_out = w2p.shape[1]

    cost = pl.CostEstimate(
        flops=2 * B * (D_in * Hp + Hp * D_out),
        transcendentals=B * (Hp + D_out),
        bytes_accessed=(x.size * 4 + w1p.size * 2 + b1p.size * 4
                        + w2p.size * 2 + b2p.size * 4 + B * D_out * 4),
    )
    vmem_limit = 32 * 1024 * 1024  # safe on v7x (64 MiB physical) and v5e/v6e

    if B > tile_b:
        # Streaming path: grid over batch only; pl.cdiv keeps ragged B on this
        # path (Pallas masks the partial last block).  Weights/biases are
        # VMEM-resident across steps (constant index_map).  tile_b >= 1024
        # amortizes the ~0.35 us/step grid cost toward the HBM roofline.
        # TODO(synk): add pipeline_mode=pl.Buffered(1) on the weight/bias specs
        #   (constant index_map) when layer widths grow enough for double-
        #   buffered weights to matter for VMEM; at Hp=128 it is noise.
        # TODO(synk): on v7x verify the batch axis really shards across the two
        #   TensorCores; if plain "parallel" does not, switch to
        #   pltpu.CORE_PARALLEL / an explicit pl.core_map over a 2-core mesh.
        call = pl.pallas_call(
            mlp_kernel,
            out_shape=jax.ShapeDtypeStruct((B, D_out), jnp.float32),
            grid_spec=pltpu.PrefetchScalarGridSpec(
                num_scalar_prefetch=0,
                grid=(pl.cdiv(B, tile_b),),
                in_specs=[
                    pl.BlockSpec((tile_b, D_in), lambda i: (i, 0)),
                    pl.BlockSpec((D_in, Hp), lambda i: (0, 0)),
                    pl.BlockSpec((1, Hp), lambda i: (0, 0)),
                    pl.BlockSpec((Hp, D_out), lambda i: (0, 0)),
                    pl.BlockSpec((1, D_out), lambda i: (0, 0)),
                ],
                out_specs=pl.BlockSpec((tile_b, D_out), lambda i: (i, 0)),
            ),
            compiler_params=pltpu.CompilerParams(
                dimension_semantics=("parallel",),
                vmem_limit_bytes=vmem_limit,
            ),
            cost_estimate=cost,
        )
    else:
        # Small batch: gridless, whole arrays in VMEM -> one dispatch total,
        # no per-step pipeline overhead, no wrapper-side convert/slice kernels.
        vm = pl.BlockSpec(memory_space=pltpu.MemorySpace.VMEM)
        call = pl.pallas_call(
            mlp_kernel,
            out_shape=jax.ShapeDtypeStruct((B, D_out), jnp.float32),
            in_specs=[vm, vm, vm, vm, vm],
            out_specs=vm,
            compiler_params=pltpu.CompilerParams(vmem_limit_bytes=vmem_limit),
            cost_estimate=cost,
        )

    return call(x, w1p, b1p, w2p, b2p)


def reference_forward(x, w1, b1, w2, b2):
    h = jax.nn.sigmoid(x @ w1 + b1)
    return jax.nn.sigmoid(h @ w2 + b2)


if __name__ == "__main__":
    # Deterministic synthetic params; shapes follow Net(D_in, H, D_out).
    B, D_in, H, D_out = 8, 32, 32, 16
    key = jax.random.PRNGKey(0)
    kx, kx2, kw1, kb1, kw2, kb2 = jax.random.split(key, 6)

    x = jax.random.normal(kx, (B, D_in), dtype=jnp.float32)
    # PyTorch nn.Linear(in, out): weight (out, in), bias (out,); stored transposed here.
    bound1 = 1.0 / (D_in ** 0.5)
    bound2 = 1.0 / (H ** 0.5)
    w1 = jax.random.uniform(kw1, (D_in, H), minval=-bound1, maxval=bound1, dtype=jnp.float32)
    b1 = jax.random.uniform(kb1, (1, H), minval=-bound1, maxval=bound1, dtype=jnp.float32)
    w2 = jax.random.uniform(kw2, (H, D_out), minval=-bound2, maxval=bound2, dtype=jnp.float32)
    b2 = jax.random.uniform(kb2, (1, D_out), minval=-bound2, maxval=bound2, dtype=jnp.float32)

    w1p, b1p, w2p, b2p = prepare_params(w1, b1, w2, b2)

    # Small-batch (gridless, single-dispatch) path.
    out = jax.block_until_ready(net_forward(x, w1p, b1p, w2p, b2p))
    ref = reference_forward(x, w1, b1, w2, b2)
    assert out.shape == (B, D_out)
    # bf16 MXU operands -> loosened tolerance vs f32 reference.
    assert jnp.allclose(out, ref, atol=2e-2, rtol=2e-2), "small-batch mismatch"

    # Streaming (batch-tiled) path, including a ragged last block (300 = 2*128 + 44).
    B2 = 300
    x2 = jax.random.normal(kx2, (B2, D_in), dtype=jnp.float32)
    out2 = jax.block_until_ready(net_forward(x2, w1p, b1p, w2p, b2p, tile_b=128))
    ref2 = reference_forward(x2, w1, b1, w2, b2)
    assert out2.shape == (B2, D_out)
    assert jnp.allclose(out2, ref2, atol=2e-2, rtol=2e-2), "streaming-path mismatch"

    print("KERNEL_OK")
</pallas_src>

<mosaic_0001>
module attributes {stable_mosaic.version = 11 : i64} {
  func.func @mlp_kernel(%arg0: memref<8x32xf32, #tpu.memory_space<vmem>>, %arg1: memref<32x128xbf16, #tpu.memory_space<vmem>>, %arg2: memref<1x128xf32, #tpu.memory_space<vmem>>, %arg3: memref<128x16xbf16, #tpu.memory_space<vmem>>, %arg4: memref<1x16xf32, #tpu.memory_space<vmem>>, %arg5: memref<8x16xf32, #tpu.memory_space<vmem>>) attributes {dimension_semantics = [], scalar_prefetch = 0 : i64, scratch_operands = 0 : i64, tpu.core_type = #tpu.core_type<tc>} {
    %c0 = arith.constant 0 : index
    %c0_0 = arith.constant 0 : index
    %0 = vector.load %arg0[%c0, %c0_0] : memref<8x32xf32, #tpu.memory_space<vmem>>, vector<8x32xf32>
    %1 = arith.truncf %0 : vector<8x32xf32> to vector<8x32xbf16>
    %c0_1 = arith.constant 0 : index
    %c0_2 = arith.constant 0 : index
    %2 = vector.load %arg1[%c0_1, %c0_2] : memref<32x128xbf16, #tpu.memory_space<vmem>>, vector<32x128xbf16>
    %cst = arith.constant dense<0.000000e+00> : vector<8x128xf32>
    %3 = tpu.matmul %1, %2, %cst {dimension_numbers = #tpu.dot_dimension_numbers<[1], [0], [0], [1], [0, 0, 1, 1], [], []>} : vector<8x32xbf16>, vector<32x128xbf16>, vector<8x128xf32> -> vector<8x128xf32>
    %c0_3 = arith.constant 0 : index
    %c0_4 = arith.constant 0 : index
    %4 = vector.load %arg2[%c0_3, %c0_4] : memref<1x128xf32, #tpu.memory_space<vmem>>, vector<1x128xf32>
    %5 = vector.broadcast %4 : vector<1x128xf32> to vector<8x128xf32>
    %6 = arith.addf %3, %5 : vector<8x128xf32>
    %cst_5 = arith.constant 0.000000e+00 : f32
    %7 = vector.broadcast %cst_5 : f32 to vector<8x128xf32>
    %8 = arith.subf %7, %6 : vector<8x128xf32>
    %9 = math.exp %8 : vector<8x128xf32>
    %cst_6 = arith.constant 1.000000e+00 : f32
    %10 = vector.broadcast %cst_6 : f32 to vector<8x128xf32>
    %11 = arith.addf %10, %9 : vector<8x128xf32>
    %12 = tpu.reciprocal %11 : vector<8x128xf32> -> vector<8x128xf32>
    %13 = arith.truncf %12 : vector<8x128xf32> to vector<8x128xbf16>
    %c0_7 = arith.constant 0 : index
    %c0_8 = arith.constant 0 : index
    %14 = vector.load %arg3[%c0_7, %c0_8] : memref<128x16xbf16, #tpu.memory_space<vmem>>, vector<128x16xbf16>
    %cst_9 = arith.constant dense<0.000000e+00> : vector<8x16xf32>
    %15 = tpu.matmul %13, %14, %cst_9 {dimension_numbers = #tpu.dot_dimension_numbers<[1], [0], [0], [1], [0, 0, 1, 1], [], []>} : vector<8x128xbf16>, vector<128x16xbf16>, vector<8x16xf32> -> vector<8x16xf32>
    %c0_10 = arith.constant 0 : index
    %c0_11 = arith.constant 0 : index
    %16 = vector.load %arg4[%c0_10, %c0_11] : memref<1x16xf32, #tpu.memory_space<vmem>>, vector<1x16xf32>
    %17 = vector.broadcast %16 : vector<1x16xf32> to vector<8x16xf32>
    %18 = arith.addf %15, %17 : vector<8x16xf32>
    %cst_12 = arith.constant 0.000000e+00 : f32
    %19 = vector.broadcast %cst_12 : f32 to vector<8x16xf32>
    %20 = arith.subf %19, %18 : vector<8x16xf32>
    %21 = math.exp %20 : vector<8x16xf32>
    %cst_13 = arith.constant 1.000000e+00 : f32
    %22 = vector.broadcast %cst_13 : f32 to vector<8x16xf32>
    %23 = arith.addf %22, %21 : vector<8x16xf32>
    %24 = tpu.reciprocal %23 : vector<8x16xf32> -> vector<8x16xf32>
    %c0_14 = arith.constant 0 : index
    %c0_15 = arith.constant 0 : index
    %25 = vector.load %arg5[%c0_14, %c0_15] : memref<8x16xf32, #tpu.memory_space<vmem>>, vector<8x16xf32>
    tpu.vector_store %arg5[%c0_14, %c0_15], %24 {strides = array<i32>} : memref<8x16xf32, #tpu.memory_space<vmem>>, vector<8x16xf32>,
    return
  }
}

</mosaic_0001>

<llo_original>
// kernel: net_forward.1
$region0: #{net_forward.1}
  #allocation0 [shape = 'u32[]', space=smem, size = 0x4, offset = 0x4, fixed_abs, tag = 'smem constant byte address 0x4 - core index']
  #allocation1 [shape = 'u32[144,128]{1,0:T(1,128)}', space=vmem, size = 0x12000, scoped, tag = 'internal scratch']
  %s0 = inlined_call_operand.vmem [shape: f32[8,32], index: 0, kind: input, shape index: {}]
  %s1 = inlined_call_operand.vmem [shape: bf16[32,128], index: 1, kind: input, shape index: {}]
  %s2 = inlined_call_operand.vmem [shape: f32[1,128], index: 2, kind: input, shape index: {}]
  %s3 = inlined_call_operand.vmem [shape: bf16[128,16], index: 3, kind: input, shape index: {}]
  %s4 = inlined_call_operand.vmem [shape: f32[1,16], index: 4, kind: input, shape index: {}]
  %s5 = inlined_call_operand.hbm [shape: f32[8,16], index: 5, kind: output, shape index: {}]
  %s6 = sld [smem:[#allocation0]]
  $region30: #{net_forward.1} parent=0
    _
  %s8 = ssub.s32 1, %s6
  %s9 = scalar_select 0, %s8, %s6
  $region1: #{net_forward.1} parent=0
    #allocation2 [shape = 'u8[4096]{0}', space=vmem, size = 0x1000, scoped, tag = 'output window, operand 0, single buffered']
    #allocation3 [shape = 's32[1]{0}', space=sflag, size = 0x4, scoped, tag = 'scoped memory for net_forward.1']
    %10 = vsyncpa [#allocation3], 0
    // Predicated region
    $region2: #{net_forward.1} parent=1 // pred_check
      _
    $region3: #{net_forward.1} parent=1 // pred_check_branch
      %12 = sbr.rel (0) target = $region5
    $region4: #{net_forward.1} parent=1 // pred_region
      _
    $region5: #{net_forward.1} parent=1 // pred_fallthru
      _
    // Predicated region
    $region6: #{net_forward.1} parent=1 // pred_check
      _
    $region7: #{net_forward.1} parent=1 // pred_check_branch
      %14 = sbr.rel (0) target = $region9
    $region8: #{net_forward.1} parent=1 // pred_region
      _
    $region9: #{net_forward.1} parent=1 // pred_fallthru
      _
    // Predicated region
    $region10: #{net_forward.1} parent=1 // pred_check
      _
    $region11: #{net_forward.1} parent=1 // pred_check_branch
      %16 = sbr.rel (0) target = $region13
    $region12: #{net_forward.1} parent=1 // pred_region
      _
    $region13: #{net_forward.1} parent=1 // pred_fallthru
      _
    // Predicated region
    $region14: #{net_forward.1} parent=1 // pred_check
      _
    $region15: #{net_forward.1} parent=1 // pred_check_branch
      %18 = sbr.rel (0) target = $region17
    $region16: #{net_forward.1} parent=1 // pred_region
      _
    $region17: #{net_forward.1} parent=1 // pred_fallthru
      _
    // Predicated region
    $region18: #{net_forward.1} parent=1 // pred_check
      _
    $region19: #{net_forward.1} parent=1 // pred_check_branch
      %20 = sbr.rel (0) target = $region21
    $region20: #{net_forward.1} parent=1 // pred_region
      _
    $region21: #{net_forward.1} parent=1 // pred_fallthru
      _
    %v22 = vld [vmem:[%s0] sm:$0xff]
    %v23 = vpack.c.bf16 %v22, %v22
    %v24 = vld [vmem:[%s1] sm:$0xf]
    %v25 = vld [vmem:[%s1 + $0x4] sm:$0xf]
    %v26 = vld [vmem:[%s1 + $0x8] sm:$0xf]
    %v27 = vld [vmem:[%s1 + $0xc] sm:$0xf]
    %v28 = vld [vmem:[%s2] sm:$0x1]
    %v30 = vlaneseq
    %v31 = vshrl.u32 %v30, 7
    %v32 = vsub.s32 0, %v31
    %v33 = vrot.slane %v28, %v32
    %v39 = vunpack.c.l.b16 %v24
    %v40 = vunpack.c.l.b16 %v25
    %v41 = vunpack.c.l.b16 %v26
    %v42 = vunpack.c.l.b16 %v27
    %v43 = vpack.c.b16 %v40, %v39
    %v44 = vpack.c.b16 %v42, %v41
    %vm47 = vcmask 261120
    %v49 = vsel %vm47, %v23, 0
    %51 = vmatprep.subr.bf16.mxu0 0
    %52 = vmatpush1.bf16.msra.mxu0 %v43
    %53 = vmatprep.subr.bf16.mxu0 0
    %54 = vmatpush1.bf16.msra.mxu0 %v44
    %55 = vmatprep.subr.bf16.mxu0 0
    %56 = vmatpush1.bf16.msra.mxu0 0
    %57 = vmatprep.subr.bf16.mxu0 0
    %58 = vmatpush1.bf16.msra.mxu0 0
    %59 = vmatprep.subr.bf16.mxu0 0
    %60 = vmatpush1.bf16.msra.mxu0 0
    %61 = vmatprep.subr.bf16.mxu0 0
    %62 = vmatpush1.bf16.msra.mxu0 0
    %63 = vmatprep.subr.bf16.mxu0 0
    %64 = vmatpush1.bf16.msra.mxu0 0
    %65 = vmatprep.subr.bf16.mxu0 0
    %66 = vmatpush1.bf16.msra.mxu0 0
    %67 = vmatprep.subr.bf16.mxu0 0
    %68 = vmatpush1.bf16.msra.mxu0 0
    %69 = vmatprep.subr.bf16.mxu0 0
    %70 = vmatpush1.bf16.msra.mxu0 0
    %71 = vmatprep.subr.bf16.mxu0 0
    %72 = vmatpush1.bf16.msra.mxu0 0
    %73 = vmatprep.subr.bf16.mxu0 0
    %74 = vmatpush1.bf16.msra.mxu0 0
    %75 = vmatprep.subr.bf16.mxu0 0
    %76 = vmatpush1.bf16.msra.mxu0 0
    %77 = vmatprep.subr.bf16.mxu0 0
    %78 = vmatpush1.bf16.msra.mxu0 0
    %79 = vmatprep.subr.bf16.mxu0 0
    %80 = vmatpush1.bf16.msra.mxu0 0
    %81 = vmatprep.subr.bf16.mxu0 0
    %82 = vmatpush1.bf16.msra.mxu0 0
    %83 = vmatprep.mubr.bf16.mxu0 0
    %84 = vmatmul.mubr.bf16.gmra.mrb[0].mxu0 %v49
    %v85 = vpop.f32.mrb[0].mxu0
    %v86 = vadd.f32 %v33, %v85
    %v87 = vpop.f32.mrb[0].mxu0
    %v88 = vpop.f32.mrb[0].mxu0
    %v89 = vpop.f32.mrb[0].mxu0
    %90 = vdwg.mxu0
    %v91 = vsub.f32 0.0, %v86
    %v92 = vmul.f32 %v91, 1.442695
    %v93 = vpow.pop %v92
    %v94 = vadd.f32 %v93, 1.0
    %v95 = vrcp.pop %v94
    %v96 = vpack.c.bf16 %v95, %v95
    %v97 = vld [vmem:[%s3] sm:$0xf]
    %v98 = vld [vmem:[%s3 + $0x4] sm:$0xf]
    %v99 = vld [vmem:[%s3 + $0x8] sm:$0xf]
    %v100 = vld [vmem:[%s3 + $0xc] sm:$0xf]
    %v101 = vld [vmem:[%s3 + $0x10] sm:$0xf]
    %v102 = vld [vmem:[%s3 + $0x14] sm:$0xf]
    %v103 = vld [vmem:[%s3 + $0x18] sm:$0xf]
    %v104 = vld [vmem:[%s3 + $0x1c] sm:$0xf]
    %v105 = vld [vmem:[%s3 + $0x20] sm:$0xf]
    %v106 = vld [vmem:[%s3 + $0x24] sm:$0xf]
    %v107 = vld [vmem:[%s3 + $0x28] sm:$0xf]
    %v108 = vld [vmem:[%s3 + $0x2c] sm:$0xf]
    %v109 = vld [vmem:[%s3 + $0x30] sm:$0xf]
    %v110 = vld [vmem:[%s3 + $0x34] sm:$0xf]
    %v111 = vld [vmem:[%s3 + $0x38] sm:$0xf]
    %v112 = vld [vmem:[%s3 + $0x3c] sm:$0xf]
    %v113 = vld [vmem:[%s4] sm:$0x1]
    %v115 = vlaneseq
    %v116 = vshrl.u32 %v115, 7
    %v117 = vsub.s32 0, %v116
    %v118 = vrot.slane %v113, %v117
    %v136 = vunpack.c.l.b16 %v97
    %v137 = vunpack.c.l.b16 %v98
    %v138 = vunpack.c.l.b16 %v99
    %v139 = vunpack.c.l.b16 %v100
    %v140 = vunpack.c.l.b16 %v101
    %v141 = vunpack.c.l.b16 %v102
    %v142 = vunpack.c.l.b16 %v103
    %v143 = vunpack.c.l.b16 %v104
    %v144 = vunpack.c.l.b16 %v105
    %v145 = vunpack.c.l.b16 %v106
    %v146 = vunpack.c.l.b16 %v107
    %v147 = vunpack.c.l.b16 %v108
    %v148 = vunpack.c.l.b16 %v109
    %v149 = vunpack.c.l.b16 %v110
    %v150 = vunpack.c.l.b16 %v111
    %v151 = vunpack.c.l.b16 %v112
    %v152 = vpack.c.b16 %v137, %v136
    %v153 = vpack.c.b16 %v139, %v138
    %v154 = vpack.c.b16 %v141, %v140
    %v155 = vpack.c.b16 %v143, %v142
    %v156 = vpack.c.b16 %v145, %v144
    %v157 = vpack.c.b16 %v147, %v146
    %v158 = vpack.c.b16 %v149, %v148
    %v159 = vpack.c.b16 %v151, %v150
    %168 = vmatprep.subr.bf16.mxu0 0
    %169 = vmatpush1.bf16.msra.mxu0 %v152
    %170 = vmatprep.subr.bf16.mxu0 0
    %171 = vmatpush1.bf16.msra.mxu0 %v153
    %172 = vmatprep.subr.bf16.mxu0 0
    %173 = vmatpush1.bf16.msra.mxu0 %v154
    %174 = vmatprep.subr.bf16.mxu0 0
    %175 = vmatpush1.bf16.msra.mxu0 %v155
    %176 = vmatprep.subr.bf16.mxu0 0
    %177 = vmatpush1.bf16.msra.mxu0 %v156
    %178 = vmatprep.subr.bf16.mxu0 0
    %179 = vmatpush1.bf16.msra.mxu0 %v157
    %180 = vmatprep.subr.bf16.mxu0 0
    %181 = vmatpush1.bf16.msra.mxu0 %v158
    %182 = vmatprep.subr.bf16.mxu0 0
    %183 = vmatpush1.bf16.msra.mxu0 %v159
    %184 = vmatprep.subr.bf16.mxu0 0
    %185 = vmatpush1.bf16.msra.mxu0 0
    %186 = vmatprep.subr.bf16.mxu0 0
    %187 = vmatpush1.bf16.msra.mxu0 0
    %188 = vmatprep.subr.bf16.mxu0 0
    %189 = vmatpush1.bf16.msra.mxu0 0
    %190 = vmatprep.subr.bf16.mxu0 0
    %191 = vmatpush1.bf16.msra.mxu0 0
    %192 = vmatprep.subr.bf16.mxu0 0
    %193 = vmatpush1.bf16.msra.mxu0 0
    %194 = vmatprep.subr.bf16.mxu0 0
    %195 = vmatpush1.bf16.msra.mxu0 0
    %196 = vmatprep.subr.bf16.mxu0 0
    %197 = vmatpush1.bf16.msra.mxu0 0
    %198 = vmatprep.subr.bf16.mxu0 0
    %199 = vmatpush1.bf16.msra.mxu0 0
    %200 = vmatprep.mubr.bf16.mxu0 0
    %201 = vmatmul.mubr.bf16.gmra.mrb[0].mxu0 %v96
    %v202 = vpop.f32.mrb[0].mxu0
    %v203 = vadd.f32 %v118, %v202
    %v204 = vpop.f32.mrb[0].mxu0
    %v205 = vpop.f32.mrb[0].mxu0
    %v206 = vpop.f32.mrb[0].mxu0
    %207 = vdwg.mxu0
    %v208 = vsub.f32 0.0, %v203
    %v209 = vmul.f32 %v208, 1.442695
    %v210 = vpow.pop %v209
    %v211 = vadd.f32 %v210, 1.0
    %v212 = vrcp.pop %v211
    %vm213 = vcmask 130048
    %214 = vst.msk [vmem:[#allocation2] sm:$0xff] %vm213, %v212
    // Predicated region
    $region22: #{net_forward.1} parent=1 // pred_check
      _
    $region23: #{net_forward.1} parent=1 // pred_check_branch
      %216 = sbr.rel (0) target = $region25
    $region24: #{net_forward.1} parent=1 // pred_region
      %s218 = ssub.s32 128, 128
      %219 = vsyncadd [#allocation3], %s218
      %s221 = sshll.u32 [#allocation2], 4
      %s222 = int_to_ptr.vmem [resolvable:$true] %s221
      %224 = dma.vmem_to_hbm [thread:$0]  %s222, 128, %s5, [#allocation3]
    $region25: #{net_forward.1} parent=1 // pred_fallthru
      _
    // Predicated region
    $region26: #{net_forward.1} parent=1 // pred_check
      _
    $region27: #{net_forward.1} parent=1 // pred_check_branch
      %226 = sbr.rel (0) target = $region29
    $region28: #{net_forward.1} parent=1 // pred_region
      %227 = dma.done [#allocation3], 128
    $region29: #{net_forward.1} parent=1 // pred_fallthru
      _
    %228 = vsyncpa [#allocation3], 1

</llo_original>
